<compile_context>
chip_gen: v7x
topology: tpu7x:2x2x1
jax: 0.10.0
libtpu: 0.0.40
codegen_flags: <defaults>
</compile_context>

<pallas_src>
import jax
import jax.numpy as jnp
from jax.experimental import pallas as pl
from jax.experimental.pallas import tpu as pltpu


def _transition_up_kernel(x_ref, w_ref, b_ref, o_ref, xp_ref):
    """One batch element per grid step.

    x_ref  : (1, H, W, Cin) bf16 input (NHWC).
    w_ref  : (4*Cin, 4*Cout_p) bf16 packed transposed-conv weights.
             Row groups = taps [x(i,j), x(i-1,j), x(i,j-1), x(i-1,j-1)];
             column groups = output parities [ee, eo, oe, oo], each Cout_p wide.
    b_ref  : (1, 4*Cout_p) f32 bias, replicated per parity group.
    o_ref  : (1, (H+1)*(W+1), 4*Cout_p) f32 parity-packed conv output.
    xp_ref : VMEM scratch (H+2, W+2, Cin) bf16 -- input with a 1-pixel zero halo.
    """
    _, H, W, Cin = x_ref.shape

    # Refresh only the zero-halo strips (interior is fully overwritten below).
    zrow = jnp.zeros((1, W + 2, Cin), dtype=jnp.bfloat16)
    zcol = jnp.zeros((H + 2, 1, Cin), dtype=jnp.bfloat16)
    xp_ref[0:1, :, :] = zrow
    xp_ref[H + 1:H + 2, :, :] = zrow
    xp_ref[:, 0:1, :] = zcol
    xp_ref[:, W + 1:W + 2, :] = zcol
    xp_ref[1:H + 1, 1:W + 1, :] = x_ref[0]

    # im2col of the 4 shifted taps -> a single MXU matmul (K = 4*Cin, N = 4*Cout_p).
    t00 = xp_ref[1:H + 2, 1:W + 2, :]   # x[i,   j  ]
    t10 = xp_ref[0:H + 1, 1:W + 2, :]   # x[i-1, j  ]
    t01 = xp_ref[1:H + 2, 0:W + 1, :]   # x[i,   j-1]
    t11 = xp_ref[0:H + 1, 0:W + 1, :]   # x[i-1, j-1]
    a = jnp.concatenate([t00, t10, t01, t11], axis=-1)
    a = a.reshape((H + 1) * (W + 1), 4 * Cin)

    acc = jnp.dot(a, w_ref[...], preferred_element_type=jnp.float32)
    o_ref[0] = acc + b_ref[...]


def _pack_weights(weight, bias, cout_p):
    """weight: (Cin, Cout, 3, 3) (PyTorch ConvTranspose2d layout); bias: (Cout,)."""
    Cin, Cout = weight.shape[0], weight.shape[1]
    w_big = jnp.zeros((4 * Cin, 4 * cout_p), jnp.float32)
    b_big = jnp.zeros((4 * cout_p,), jnp.float32)
    # (parity group, tap) -> kernel tap (ky, kx).
    # groups: 0=ee -> out[2i,2j], 1=eo -> out[2i,2j+1], 2=oe -> out[2i+1,2j], 3=oo -> out[2i+1,2j+1]
    # taps  : 0=x[i,j], 1=x[i-1,j], 2=x[i,j-1], 3=x[i-1,j-1]
    taps = {(0, 0): (0, 0), (0, 1): (2, 0), (0, 2): (0, 2), (0, 3): (2, 2),
            (1, 0): (0, 1), (1, 1): (2, 1),
            (2, 0): (1, 0), (2, 2): (1, 2),
            (3, 0): (1, 1)}
    for (g, t), (ky, kx) in taps.items():
        w_big = w_big.at[t * Cin:(t + 1) * Cin,
                         g * cout_p:g * cout_p + Cout].set(weight[:, :, ky, kx])
    for g in range(4):
        b_big = b_big.at[g * cout_p:g * cout_p + Cout].set(bias)
    return w_big.astype(jnp.bfloat16), b_big.reshape(1, 4 * cout_p)


def transition_up_forward(x, skip, weight, bias):
    """x: (N, Cin, H, W), skip: (N, Cskip, Hs, Ws), weight: (Cin, Cout, 3, 3), bias: (Cout,).
    Returns (N, Cout + Cskip, Hs, Ws) -- same semantics as TransitionUp.forward(x, skip)."""
    N, Cin, H, W = x.shape
    Cout = weight.shape[1]
    Hs, Ws = skip.shape[2], skip.shape[3]
    Ho, Wo = 2 * H + 1, 2 * W + 1                      # ConvTranspose2d output size
    cout_p = ((Cout + 31) // 32) * 32                  # 4*cout_p is a multiple of 128
    n_lanes = 4 * cout_p
    rows = (H + 1) * (W + 1)

    w_big, b_big = _pack_weights(weight, bias, cout_p)
    x_nhwc = jnp.transpose(x, (0, 2, 3, 1)).astype(jnp.bfloat16)

    y = pl.pallas_call(
        _transition_up_kernel,
        out_shape=jax.ShapeDtypeStruct((N, rows, n_lanes), jnp.float32),
        grid_spec=pltpu.PrefetchScalarGridSpec(
            num_scalar_prefetch=0,
            grid=(N,),
            in_specs=[
                pl.BlockSpec((1, H, W, Cin), lambda n: (n, 0, 0, 0)),
                pl.BlockSpec((4 * Cin, n_lanes), lambda n: (0, 0)),
                pl.BlockSpec((1, n_lanes), lambda n: (0, 0)),
            ],
            out_specs=pl.BlockSpec((1, rows, n_lanes), lambda n: (n, 0, 0)),
            scratch_shapes=[pltpu.VMEM((H + 2, W + 2, Cin), jnp.bfloat16)],
        ),
        compiler_params=pltpu.CompilerParams(
            dimension_semantics=("parallel",)),
    )(x_nhwc, w_big, b_big)

    # 2x2 depth-to-space of the parity groups -> NHWC transposed-conv output.
    y = y.reshape(N, H + 1, W + 1, 2, 2, cout_p)
    y = jnp.transpose(y, (0, 1, 3, 2, 4, 5)).reshape(N, 2 * (H + 1), 2 * (W + 1), cout_p)
    y = y[:, :Ho, :Wo, :Cout]                          # drop zero pad row/col/channels
    # center_crop to skip spatial size, back to NCHW, concat along channels.
    r0 = (Ho - Hs) // 2
    c0 = (Wo - Ws) // 2
    y = y[:, r0:r0 + Hs, c0:c0 + Ws, :]
    y = jnp.transpose(y, (0, 3, 1, 2))
    return jnp.concatenate([y, skip.astype(y.dtype)], axis=1)


# ----------------------------- pure-JAX reference -----------------------------
def _reference_forward(x, skip, weight, bias):
    N, Cin, H, W = x.shape
    Cout = weight.shape[1]
    Ho, Wo = 2 * H + 1, 2 * W + 1
    out = jnp.zeros((N, Cout, Ho, Wo), jnp.float32)
    for ky in range(3):
        for kx in range(3):
            contrib = jnp.einsum("nchw,cd->ndhw", x, weight[:, :, ky, kx])
            out = out.at[:, :, ky:ky + 2 * H:2, kx:kx + 2 * W:2].add(contrib)
    out = out + bias[None, :, None, None]
    Hs, Ws = skip.shape[2], skip.shape[3]
    r0 = (Ho - Hs) // 2
    c0 = (Wo - Ws) // 2
    out = out[:, :, r0:r0 + Hs, c0:c0 + Ws]            # center_crop
    return jnp.concatenate([out, skip], axis=1)


if __name__ == "__main__":
    # TransitionUp(in_channels=4, out_channels=8); x is the low-res feature map,
    # skip is the pre-downsample encoder feature (2x spatial, 6 channels).
    N, Cin, Cout, H, W = 2, 4, 8, 8, 8
    Cskip, Hs, Ws = 6, 16, 16

    key = jax.random.PRNGKey(0)
    kx, ks, kw, kb = jax.random.split(key, 4)
    x = jax.random.normal(kx, (N, Cin, H, W), jnp.float32)
    skip = jax.random.normal(ks, (N, Cskip, Hs, Ws), jnp.float32)
    weight = 0.1 * jax.random.normal(kw, (Cin, Cout, 3, 3), jnp.float32)  # PyTorch layout
    bias = 0.1 * jax.random.normal(kb, (Cout,), jnp.float32)

    out = transition_up_forward(x, skip, weight, bias)
    out = jax.block_until_ready(out)
    assert out.shape == (N, Cout + Cskip, Hs, Ws), out.shape

    ref = _reference_forward(x, skip, weight, bias)
    err = float(jnp.max(jnp.abs(out - ref)))
    assert jnp.allclose(out, ref, rtol=1e-2, atol=1e-2), err

    print("KERNEL_OK")
</pallas_src>

<mosaic_0001>
module attributes {stable_mosaic.version = 11 : i64} {
  func.func @_transition_up_kernel(%arg0: i32, %arg1: memref<1x8x8x4xbf16, #tpu.memory_space<vmem>>, %arg2: memref<16x128xbf16, #tpu.memory_space<vmem>>, %arg3: memref<1x128xf32, #tpu.memory_space<vmem>>, %arg4: memref<1x81x128xf32, #tpu.memory_space<vmem>>, %arg5: memref<10x10x4xbf16, #tpu.memory_space<vmem>>) attributes {dimension_semantics = [#tpu.dimension_semantics<parallel>], iteration_bounds = array<i64: 2>, scalar_prefetch = 0 : i64, scratch_operands = 1 : i64, tpu.core_type = #tpu.core_type<tc>, window_params = [{transform_indices = @transform_0, window_bounds = array<i64: 1, 8, 8, 4>}, {pipeline_mode = #tpu.pipeline_mode<synchronous>, transform_indices = @transform_1, window_bounds = array<i64: 16, 128>}, {pipeline_mode = #tpu.pipeline_mode<synchronous>, transform_indices = @transform_2, window_bounds = array<i64: 1, 128>}, {transform_indices = @transform_3, window_bounds = array<i64: 1, 81, 128>}]} {
    %cst = arith.constant 0.000000e+00 : bf16
    %0 = vector.broadcast %cst : bf16 to vector<1x10x4xbf16>
    %cst_0 = arith.constant 0.000000e+00 : bf16
    %1 = vector.broadcast %cst_0 : bf16 to vector<10x1x4xbf16>
    %c0 = arith.constant 0 : index
    %c0_1 = arith.constant 0 : index
    %c0_2 = arith.constant 0 : index
    %2 = vector.load %arg5[%c0, %c0_1, %c0_2] : memref<10x10x4xbf16, #tpu.memory_space<vmem>>, vector<1x10x4xbf16>
    tpu.vector_store %arg5[%c0, %c0_1, %c0_2], %0 {strides = array<i32>} : memref<10x10x4xbf16, #tpu.memory_space<vmem>>, vector<1x10x4xbf16>,
    %c9 = arith.constant 9 : index
    %c0_3 = arith.constant 0 : index
    %c0_4 = arith.constant 0 : index
    %3 = vector.load %arg5[%c9, %c0_3, %c0_4] : memref<10x10x4xbf16, #tpu.memory_space<vmem>>, vector<1x10x4xbf16>
    tpu.vector_store %arg5[%c9, %c0_3, %c0_4], %0 {strides = array<i32>} : memref<10x10x4xbf16, #tpu.memory_space<vmem>>, vector<1x10x4xbf16>,
    %c0_5 = arith.constant 0 : index
    %c0_6 = arith.constant 0 : index
    %c0_7 = arith.constant 0 : index
    %4 = vector.load %arg5[%c0_5, %c0_6, %c0_7] : memref<10x10x4xbf16, #tpu.memory_space<vmem>>, vector<10x1x4xbf16>
    tpu.vector_store %arg5[%c0_5, %c0_6, %c0_7], %1 {strides = array<i32>} : memref<10x10x4xbf16, #tpu.memory_space<vmem>>, vector<10x1x4xbf16>,
    %c0_8 = arith.constant 0 : index
    %c9_9 = arith.constant 9 : index
    %c0_10 = arith.constant 0 : index
    %5 = vector.load %arg5[%c0_8, %c9_9, %c0_10] : memref<10x10x4xbf16, #tpu.memory_space<vmem>>, vector<10x1x4xbf16>
    tpu.vector_store %arg5[%c0_8, %c9_9, %c0_10], %1 {strides = array<i32>} : memref<10x10x4xbf16, #tpu.memory_space<vmem>>, vector<10x1x4xbf16>,
    %c0_11 = arith.constant 0 : index
    %c0_12 = arith.constant 0 : index
    %c0_13 = arith.constant 0 : index
    %c0_14 = arith.constant 0 : index
    %6 = vector.load %arg1[%c0_11, %c0_12, %c0_13, %c0_14] : memref<1x8x8x4xbf16, #tpu.memory_space<vmem>>, vector<1x8x8x4xbf16>
    %7 = vector.shape_cast %6 : vector<1x8x8x4xbf16> to vector<8x8x4xbf16>
    %c1 = arith.constant 1 : index
    %c1_15 = arith.constant 1 : index
    %c0_16 = arith.constant 0 : index
    %8 = vector.load %arg5[%c1, %c1_15, %c0_16] : memref<10x10x4xbf16, #tpu.memory_space<vmem>>, vector<8x8x4xbf16>
    tpu.vector_store %arg5[%c1, %c1_15, %c0_16], %7 {strides = array<i32>} : memref<10x10x4xbf16, #tpu.memory_space<vmem>>, vector<8x8x4xbf16>,
    %c1_17 = arith.constant 1 : index
    %c1_18 = arith.constant 1 : index
    %c0_19 = arith.constant 0 : index
    %9 = vector.load %arg5[%c1_17, %c1_18, %c0_19] : memref<10x10x4xbf16, #tpu.memory_space<vmem>>, vector<9x9x4xbf16>
    %c0_20 = arith.constant 0 : index
    %c1_21 = arith.constant 1 : index
    %c0_22 = arith.constant 0 : index
    %10 = vector.load %arg5[%c0_20, %c1_21, %c0_22] : memref<10x10x4xbf16, #tpu.memory_space<vmem>>, vector<9x9x4xbf16>
    %c1_23 = arith.constant 1 : index
    %c0_24 = arith.constant 0 : index
    %c0_25 = arith.constant 0 : index
    %11 = vector.load %arg5[%c1_23, %c0_24, %c0_25] : memref<10x10x4xbf16, #tpu.memory_space<vmem>>, vector<9x9x4xbf16>
    %c0_26 = arith.constant 0 : index
    %c0_27 = arith.constant 0 : index
    %c0_28 = arith.constant 0 : index
    %12 = vector.load %arg5[%c0_26, %c0_27, %c0_28] : memref<10x10x4xbf16, #tpu.memory_space<vmem>>, vector<9x9x4xbf16>
    %13 = tpu.concatenate %9, %10, %11, %12 in 2 : vector<9x9x4xbf16>, vector<9x9x4xbf16>, vector<9x9x4xbf16>, vector<9x9x4xbf16> -> vector<9x9x16xbf16>
    %14 = vector.shape_cast %13 : vector<9x9x16xbf16> to vector<81x16xbf16>
    %c0_29 = arith.constant 0 : index
    %c0_30 = arith.constant 0 : index
    %15 = vector.load %arg2[%c0_29, %c0_30] : memref<16x128xbf16, #tpu.memory_space<vmem>>, vector<16x128xbf16>
    %cst_31 = arith.constant dense<0.000000e+00> : vector<81x128xf32>
    %16 = tpu.matmul %14, %15, %cst_31 {dimension_numbers = #tpu.dot_dimension_numbers<[1], [0], [0], [1], [0, 0, 1, 1], [], []>} : vector<81x16xbf16>, vector<16x128xbf16>, vector<81x128xf32> -> vector<81x128xf32>
    %c0_32 = arith.constant 0 : index
    %c0_33 = arith.constant 0 : index
    %17 = vector.load %arg3[%c0_32, %c0_33] : memref<1x128xf32, #tpu.memory_space<vmem>>, vector<1x128xf32>
    %18 = vector.broadcast %17 : vector<1x128xf32> to vector<81x128xf32>
    %19 = arith.addf %16, %18 : vector<81x128xf32>
    %c0_34 = arith.constant 0 : index
    %c0_35 = arith.constant 0 : index
    %c0_36 = arith.constant 0 : index
    %20 = vector.load %arg4[%c0_34, %c0_35, %c0_36] : memref<1x81x128xf32, #tpu.memory_space<vmem>>, vector<1x81x128xf32>
    %21 = vector.shape_cast %20 : vector<1x81x128xf32> to vector<81x128xf32>
    %22 = vector.shape_cast %19 : vector<81x128xf32> to vector<1x81x128xf32>
    tpu.vector_store %arg4[%c0_34, %c0_35, %c0_36], %22 {strides = array<i32>} : memref<1x81x128xf32, #tpu.memory_space<vmem>>, vector<1x81x128xf32>,
    return
  }
  func.func @transform_0(%arg0: i32) -> (i32, i32, i32, i32) {
    %c0_i32 = arith.constant 0 : i32
    %c0_i32_0 = arith.constant 0 : i32
    %c0_i32_1 = arith.constant 0 : i32
    %c0_i32_2 = arith.constant 0 : i32
    return %arg0, %c0_i32, %c0_i32_0, %c0_i32_1 : i32, i32, i32, i32
  }
  func.func @transform_1(%arg0: i32) -> (i32, i32) {
    %c0_i32 = arith.constant 0 : i32
    %c0_i32_0 = arith.constant 0 : i32
    %c0_i32_1 = arith.constant 0 : i32
    return %c0_i32, %c0_i32_0 : i32, i32
  }
  func.func @transform_2(%arg0: i32) -> (i32, i32) {
    %c0_i32 = arith.constant 0 : i32
    %c0_i32_0 = arith.constant 0 : i32
    %c0_i32_1 = arith.constant 0 : i32
    return %c0_i32, %c0_i32_0 : i32, i32
  }
  func.func @transform_3(%arg0: i32) -> (i32, i32, i32) {
    %c0_i32 = arith.constant 0 : i32
    %c0_i32_0 = arith.constant 0 : i32
    %c0_i32_1 = arith.constant 0 : i32
    return %arg0, %c0_i32, %c0_i32_0 : i32, i32, i32
  }
}

</mosaic_0001>

<llo_original>
// kernel: tpu_custom_call.1
$region0: #{tpu_custom_call.1}
  #allocation0 [shape = 'u32[]', space=smem, size = 0x4, offset = 0x4, fixed_abs, tag = 'smem constant byte address 0x4 - core index']
  #allocation1 [shape = 'u32[144,128]{1,0:T(1,128)}', space=vmem, size = 0x12000, scoped, tag = 'internal scratch']
  #allocation2 [shape = 'bf16[10,10,4]{2,1,0:T(8,128)(2,1)}', space=vmem, size = 0xa000, scoped, tag = 'scratch operand']
  %s0 = inlined_call_operand.vmem [shape: bf16[2,8,8,4], index: 0, kind: input, shape index: {}]
  %s1 = inlined_call_operand.vmem [shape: bf16[16,128], index: 1, kind: input, shape index: {}]
  %s2 = inlined_call_operand.vmem [shape: f32[1,128], index: 2, kind: input, shape index: {}]
  %s3 = inlined_call_operand.vmem [shape: f32[2,81,128], index: 3, kind: output, shape index: {}]
  %s4 = sld [smem:[#allocation0]]
  $region45: #{tpu_custom_call.1} parent=0
    _
  %s6 = ssub.s32 1, %s4
  %s7 = scalar_select 0, %s6, %s4
  loop: start=0, step=1, limit=4
  $region2: #{tpu_custom_call.1} parent=0 // loop_pre_header
    _
  $region3: #{tpu_custom_call.1} parent=0 // loop_header
    %s9 = sphi 0, %s13
    %p10 = scmp.ge.s32.totalorder %s9, 4
    %s19 = sphi 0, %s21
    %s22 = sphi 0, %s19
    %s23 = sphi 0, %s22
    %s39 = sphi 0, %s23
    %s43 = sphi 0, %s43
    %s45 = sphi 0, %s43
    %s46 = sphi 0, %s45
    %s60 = sphi 0, %s46
    %s64 = sphi 0, %s64
    %s66 = sphi 0, %s64
    %s67 = sphi 0, %s66
    %s81 = sphi 0, %s67
    %s87 = sphi 0, %s89
    %s90 = sphi 0, %s87
    %s91 = sphi 0, %s90
    %s107 = sphi 0, %s91
  $region4: #{tpu_custom_call.1} parent=0 // loop_header_branch
    %12 = sbr.rel (%p10) target = $region8
  $region5: #{tpu_custom_call.1} parent=0 // loop_body
    %s14 = ssub.s32 %s9, 1
    %s15 = ssub.s32 %s9, 2
    %s16 = sadd.s32 %s9, 1
    %s17 = ssub.s32 %s9, %s16
    %p18 = scmp.eq.s32.totalorder %s17, 0
    %s20 = sadd.s32 %s19, 1
    %s21 = scalar_select %p18, %s19, %s20
    %p24 = pneg %p18
    %p25 = scmp.eq.s32.totalorder %s9, 1
    %p26 = por %p24, %p25
    %p27 = scmp.ne.s32.totalorder %s19, %s22
    %p28 = scmp.eq.s32.totalorder %s9, 0
    %p29 = por %p27, %p28
    %p30 = scmp.ne.s32.totalorder %s19, %s22
    %p31 = scmp.eq.s32.totalorder %s14, 1
    %p32 = por %p30, %p31
    %p33 = scmp.ne.s32.totalorder %s22, %s23
    %p34 = scmp.eq.s32.totalorder %s14, 0
    %p35 = por %p33, %p34
    %p36 = scmp.ne.s32.totalorder %s22, %s23
    %p37 = scmp.eq.s32.totalorder %s15, 1
    %p38 = por %p36, %p37
    %p40 = scmp.ne.s32.totalorder %s23, %s39
    %p41 = scmp.eq.s32.totalorder %s15, 0
    %p42 = por %p40, %p41
    %s44 = sadd.s32 %s43, 1
    %p47 = scmp.eq.s32.totalorder %s9, 1
    %p48 = scmp.ne.s32.totalorder %s43, %s45
    %p49 = scmp.eq.s32.totalorder %s9, 0
    %p50 = por %p48, %p49
    %p51 = scmp.ne.s32.totalorder %s43, %s45
    %p52 = scmp.eq.s32.totalorder %s14, 1
    %p53 = por %p51, %p52
    %p54 = scmp.ne.s32.totalorder %s45, %s46
    %p55 = scmp.eq.s32.totalorder %s14, 0
    %p56 = por %p54, %p55
    %p57 = scmp.ne.s32.totalorder %s45, %s46
    %p58 = scmp.eq.s32.totalorder %s15, 1
    %p59 = por %p57, %p58
    %p61 = scmp.ne.s32.totalorder %s46, %s60
    %p62 = scmp.eq.s32.totalorder %s15, 0
    %p63 = por %p61, %p62
    %s65 = sadd.s32 %s64, 1
    %p68 = scmp.eq.s32.totalorder %s9, 1
    %p69 = scmp.ne.s32.totalorder %s64, %s66
    %p70 = scmp.eq.s32.totalorder %s9, 0
    %p71 = por %p69, %p70
    %p72 = scmp.ne.s32.totalorder %s64, %s66
    %p73 = scmp.eq.s32.totalorder %s14, 1
    %p74 = por %p72, %p73
    %p75 = scmp.ne.s32.totalorder %s66, %s67
    %p76 = scmp.eq.s32.totalorder %s14, 0
    %p77 = por %p75, %p76
    %p78 = scmp.ne.s32.totalorder %s66, %s67
    %p79 = scmp.eq.s32.totalorder %s15, 1
    %p80 = por %p78, %p79
    %p82 = scmp.ne.s32.totalorder %s67, %s81
    %p83 = scmp.eq.s32.totalorder %s15, 0
    %p84 = por %p82, %p83
    %s85 = ssub.s32 %s9, %s16
    %p86 = scmp.eq.s32.totalorder %s85, 0
    %s88 = sadd.s32 %s87, 1
    %s89 = scalar_select %p86, %s87, %s88
    %p92 = pneg %p86
    %p93 = scmp.eq.s32.totalorder %s9, 1
    %p94 = por %p92, %p93
    %p95 = scmp.ne.s32.totalorder %s87, %s90
    %p96 = scmp.eq.s32.totalorder %s9, 0
    %p97 = por %p95, %p96
    %p98 = scmp.ne.s32.totalorder %s87, %s90
    %p99 = scmp.eq.s32.totalorder %s14, 1
    %p100 = por %p98, %p99
    %p101 = scmp.ne.s32.totalorder %s90, %s91
    %p102 = scmp.eq.s32.totalorder %s14, 0
    %p103 = por %p101, %p102
    %p104 = scmp.ne.s32.totalorder %s90, %s91
    %p105 = scmp.eq.s32.totalorder %s15, 1
    %p106 = por %p104, %p105
    %p108 = scmp.ne.s32.totalorder %s91, %s107
    %p109 = scmp.eq.s32.totalorder %s15, 0
    %p110 = por %p108, %p109
    %p111 = scmp.le.s32.totalorder 1, %s9
    %p112 = scmp.lt.s32.totalorder %s9, 3
    %p113 = pnand %p111, %p112
    %p114 = pneg %p113
    // Predicated region
    $region9: #{tpu_custom_call.1} parent=5 // pred_check
      _
    $region10: #{tpu_custom_call.1} parent=5 // pred_check_branch
      %116 = sbr.rel (%p113) target = $region12
    $region11: #{tpu_custom_call.1} parent=5 // pred_region
      %s117 = ssub.s32 %s9, 1
      // Predicated region
      $region13: #{tpu_custom_call.1} parent=11 // pred_check
        %p118 = pneg %p56
      $region14: #{tpu_custom_call.1} parent=11 // pred_check_branch
        %120 = sbr.rel (%p118) target = $region16
      $region15: #{tpu_custom_call.1} parent=11 // pred_region
        _
      $region16: #{tpu_custom_call.1} parent=11 // pred_fallthru
        _
      // Predicated region
      $region17: #{tpu_custom_call.1} parent=11 // pred_check
        %p121 = pneg %p77
      $region18: #{tpu_custom_call.1} parent=11 // pred_check_branch
        %123 = sbr.rel (%p121) target = $region20
      $region19: #{tpu_custom_call.1} parent=11 // pred_region
        _
      $region20: #{tpu_custom_call.1} parent=11 // pred_fallthru
        _
    $region12: #{tpu_custom_call.1} parent=5 // pred_fallthru
      _
    %p124 = scmp.lt.s32.totalorder %s9, 2
    // Predicated region
    $region21: #{tpu_custom_call.1} parent=5 // pred_check
      %p125 = pneg %p124
    $region22: #{tpu_custom_call.1} parent=5 // pred_check_branch
      %127 = sbr.rel (%p125) target = $region24
    $region23: #{tpu_custom_call.1} parent=5 // pred_region
      // Predicated region
      $region25: #{tpu_custom_call.1} parent=23 // pred_check
        %p128 = pneg %p29
      $region26: #{tpu_custom_call.1} parent=23 // pred_check_branch
        %130 = sbr.rel (%p128) target = $region28
      $region27: #{tpu_custom_call.1} parent=23 // pred_region
        %p131 = scmp.lt.s32.totalorder %s9, 1
        %s132 = scalar_select %p131, %s9, 1
        %s133 = smul.addr %s132, 8
        %s134 = smul.addr %s133, 4
        %s135 = scalar_lea.vmem %s0, %s134
      $region28: #{tpu_custom_call.1} parent=23 // pred_fallthru
        _
    $region24: #{tpu_custom_call.1} parent=5 // pred_fallthru
      _
    %p136 = scmp.le.s32.totalorder 1, %s9
    %p137 = scmp.lt.s32.totalorder %s9, 3
    %p138 = pnand %p136, %p137
    %p139 = pneg %p138
    // Predicated region
    $region29: #{tpu_custom_call.1} parent=5 // pred_check
      _
    $region30: #{tpu_custom_call.1} parent=5 // pred_check_branch
      %141 = sbr.rel (%p138) target = $region32
    $region31: #{tpu_custom_call.1} parent=5 // pred_region
      %s142 = ssub.s32 %s9, 1
      %p143 = scmp.lt.s32.totalorder %s14, 1
      %s144 = scalar_select %p143, %s14, 1
      %s145 = smul.addr %s144, 8
      %s146 = smul.addr %s145, 4
      %s147 = scalar_lea.vmem %s0, %s146
      %p148 = pneg %p35
      %p149 = pneg %p32
      %p150 = pneg %p56
      %p151 = pneg %p53
      %p152 = pneg %p77
      %p153 = pneg %p74
      %p154 = pneg %p103
      %p155 = pneg %p100
      %p156 = scmp.lt.s32.totalorder %s14, 1
      %s157 = scalar_select %p156, %s14, 1
      %s158 = smul.addr %s157, 11
      %s159 = smul.addr %s158, 8
      %s160 = scalar_lea.vmem %s3, %s159
      %p161 = scmp.lt.s32.totalorder %s14, 1
      %s162 = scalar_select %p161, %s14, 1
      %s163 = smul.addr %s162, 8
      %s164 = smul.addr %s163, 4
      %s165 = scalar_lea.vmem %s0, %s164
      %p166 = scmp.lt.s32.totalorder %s14, 1
      %s167 = scalar_select %p166, %s14, 1
      %s168 = smul.addr %s167, 11
      %s169 = smul.addr %s168, 8
      %s170 = scalar_lea.vmem %s3, %s169
      %vm172 = vcmask 27648
      %173 = vst.msk [vmem:[#allocation2] sm:$0xf] %vm172, 0
      %vm174 = vcmask 24576
      %175 = vst.msk [vmem:[#allocation2 + $0x4] sm:$0x1] %vm174, 0
      %s176 = scalar_lea.vmem [#allocation2], 72
      %177 = vst.msk [vmem:[%s176] sm:$0xf] %vm172, 0
      %178 = vst.msk [vmem:[%s176 + $0x4] sm:$0x1] %vm174, 0
      %vm179 = vcmask 24576
      %vm180 = vsmask.f32 256
      %vm181 = vmand %vm179, %vm180
      %v182 = vld [vmem:[#allocation2] sm:$0x1]
      %v183 = vsel %vm181, 0, %v182
      %184 = vst [vmem:[#allocation2] sm:$0x1] %v183
      %v185 = vld [vmem:[#allocation2 + $0x8] sm:$0x1]
      %v186 = vsel %vm181, 0, %v185
      %187 = vst [vmem:[#allocation2 + $0x8] sm:$0x1] %v186
      %v188 = vld [vmem:[#allocation2 + $0x10] sm:$0x1]
      %v189 = vsel %vm181, 0, %v188
      %190 = vst [vmem:[#allocation2 + $0x10] sm:$0x1] %v189
      %v191 = vld [vmem:[#allocation2 + $0x18] sm:$0x1]
      %v192 = vsel %vm181, 0, %v191
      %193 = vst [vmem:[#allocation2 + $0x18] sm:$0x1] %v192
      %v194 = vld [vmem:[#allocation2 + $0x20] sm:$0x1]
      %v195 = vsel %vm181, 0, %v194
      %196 = vst [vmem:[#allocation2 + $0x20] sm:$0x1] %v195
      %v197 = vld [vmem:[#allocation2 + $0x28] sm:$0x1]
      %v198 = vsel %vm181, 0, %v197
      %199 = vst [vmem:[#allocation2 + $0x28] sm:$0x1] %v198
      %v200 = vld [vmem:[#allocation2 + $0x30] sm:$0x1]
      %v201 = vsel %vm181, 0, %v200
      %202 = vst [vmem:[#allocation2 + $0x30] sm:$0x1] %v201
      %v203 = vld [vmem:[#allocation2 + $0x38] sm:$0x1]
      %v204 = vsel %vm181, 0, %v203
      %205 = vst [vmem:[#allocation2 + $0x38] sm:$0x1] %v204
      %v206 = vld [vmem:[#allocation2 + $0x40] sm:$0x1]
      %v207 = vsel %vm181, 0, %v206
      %208 = vst [vmem:[#allocation2 + $0x40] sm:$0x1] %v207
      %v209 = vld [vmem:[#allocation2 + $0x48] sm:$0x1]
      %v210 = vsel %vm181, 0, %v209
      %211 = vst [vmem:[#allocation2 + $0x48] sm:$0x1] %v210
      %vm212 = vsmask.f32 7938
      %vm213 = vmand %vm179, %vm212
      %v214 = vld [vmem:[#allocation2 + $0x4] sm:$0x1]
      %v215 = vsel %vm213, 0, %v214
      %216 = vst [vmem:[#allocation2 + $0x4] sm:$0x1] %v215
      %v217 = vld [vmem:[#allocation2 + $0xc] sm:$0x1]
      %v218 = vsel %vm213, 0, %v217
      %219 = vst [vmem:[#allocation2 + $0xc] sm:$0x1] %v218
      %v220 = vld [vmem:[#allocation2 + $0x14] sm:$0x1]
      %v221 = vsel %vm213, 0, %v220
      %222 = vst [vmem:[#allocation2 + $0x14] sm:$0x1] %v221
      %v223 = vld [vmem:[#allocation2 + $0x1c] sm:$0x1]
      %v224 = vsel %vm213, 0, %v223
      %225 = vst [vmem:[#allocation2 + $0x1c] sm:$0x1] %v224
      %v226 = vld [vmem:[#allocation2 + $0x24] sm:$0x1]
      %v227 = vsel %vm213, 0, %v226
      %228 = vst [vmem:[#allocation2 + $0x24] sm:$0x1] %v227
      %v229 = vld [vmem:[#allocation2 + $0x2c] sm:$0x1]
      %v230 = vsel %vm213, 0, %v229
      %231 = vst [vmem:[#allocation2 + $0x2c] sm:$0x1] %v230
      %v232 = vld [vmem:[#allocation2 + $0x34] sm:$0x1]
      %v233 = vsel %vm213, 0, %v232
      %234 = vst [vmem:[#allocation2 + $0x34] sm:$0x1] %v233
      %v235 = vld [vmem:[#allocation2 + $0x3c] sm:$0x1]
      %v236 = vsel %vm213, 0, %v235
      %237 = vst [vmem:[#allocation2 + $0x3c] sm:$0x1] %v236
      %v238 = vld [vmem:[#allocation2 + $0x44] sm:$0x1]
      %v239 = vsel %vm213, 0, %v238
      %240 = vst [vmem:[#allocation2 + $0x44] sm:$0x1] %v239
      %v241 = vld [vmem:[#allocation2 + $0x4c] sm:$0x1]
      %v242 = vsel %vm213, 0, %v241
      %243 = vst [vmem:[#allocation2 + $0x4c] sm:$0x1] %v242
      %v244 = vld [vmem:[%s165] sm:$0xf]
      %v245 = vld [vmem:[%s165 + $0x4] sm:$0xf]
      %v246 = vld [vmem:[%s165 + $0x8] sm:$0xf]
      %v247 = vld [vmem:[%s165 + $0xc] sm:$0xf]
      %v248 = vld [vmem:[%s165 + $0x10] sm:$0xf]
      %v249 = vld [vmem:[%s165 + $0x14] sm:$0xf]
      %v250 = vld [vmem:[%s165 + $0x18] sm:$0xf]
      %v251 = vld [vmem:[%s165 + $0x1c] sm:$0xf]
      %v253 = vshrl.u32 %v244, 16
      %v255 = vrot.slane %v253, 7
      %v256 = vshll.u32 %v244, 16
      %v258 = vor.u32 %v255, %v256
      %v259 = vrot.slane %v255, 4
      %v261 = vshrl.u32 %v245, 16
      %v263 = vrot.slane %v261, 7
      %v264 = vshll.u32 %v245, 16
      %v266 = vor.u32 %v263, %v264
      %v267 = vrot.slane %v263, 4
      %v269 = vshrl.u32 %v246, 16
      %v271 = vrot.slane %v269, 7
      %v272 = vshll.u32 %v246, 16
      %v274 = vor.u32 %v271, %v272
      %v275 = vrot.slane %v271, 4
      %v277 = vshrl.u32 %v247, 16
      %v279 = vrot.slane %v277, 7
      %v280 = vshll.u32 %v247, 16
      %v282 = vor.u32 %v279, %v280
      %v283 = vrot.slane %v279, 4
      %v285 = vshrl.u32 %v248, 16
      %v287 = vrot.slane %v285, 7
      %v288 = vshll.u32 %v248, 16
      %v290 = vor.u32 %v287, %v288
      %v291 = vrot.slane %v287, 4
      %v293 = vshrl.u32 %v249, 16
      %v295 = vrot.slane %v293, 7
      %v296 = vshll.u32 %v249, 16
      %v298 = vor.u32 %v295, %v296
      %v299 = vrot.slane %v295, 4
      %v301 = vshrl.u32 %v250, 16
      %v303 = vrot.slane %v301, 7
      %v304 = vshll.u32 %v250, 16
      %v306 = vor.u32 %v303, %v304
      %v307 = vrot.slane %v303, 4
      %v309 = vshrl.u32 %v251, 16
      %v311 = vrot.slane %v309, 7
      %v312 = vshll.u32 %v251, 16
      %v314 = vor.u32 %v311, %v312
      %v315 = vrot.slane %v311, 4
      %s332 = scalar_lea.vmem [#allocation2], 8
      %vm333 = vcmask 27648
      %vm334 = vmand %vm333, %vm212
      %v335 = vld [vmem:[%s332] sm:$0xf]
      %v336 = vsel %vm334, %v258, %v335
      %337 = vst [vmem:[%s332] sm:$0xf] %v336
      %v338 = vld [vmem:[%s332 + $0x4] sm:$0x1]
      %v339 = vsel %vm181, %v259, %v338
      %340 = vst [vmem:[%s332 + $0x4] sm:$0x1] %v339
      %v341 = vld [vmem:[%s332 + $0x8] sm:$0xf]
      %v342 = vsel %vm334, %v266, %v341
      %343 = vst [vmem:[%s332 + $0x8] sm:$0xf] %v342
      %v344 = vld [vmem:[%s332 + $0xc] sm:$0x1]
      %v345 = vsel %vm181, %v267, %v344
      %346 = vst [vmem:[%s332 + $0xc] sm:$0x1] %v345
      %v347 = vld [vmem:[%s332 + $0x10] sm:$0xf]
      %v348 = vsel %vm334, %v274, %v347
      %349 = vst [vmem:[%s332 + $0x10] sm:$0xf] %v348
      %v350 = vld [vmem:[%s332 + $0x14] sm:$0x1]
      %v351 = vsel %vm181, %v275, %v350
      %352 = vst [vmem:[%s332 + $0x14] sm:$0x1] %v351
      %v353 = vld [vmem:[%s332 + $0x18] sm:$0xf]
      %v354 = vsel %vm334, %v282, %v353
      %355 = vst [vmem:[%s332 + $0x18] sm:$0xf] %v354
      %v356 = vld [vmem:[%s332 + $0x1c] sm:$0x1]
      %v357 = vsel %vm181, %v283, %v356
      %358 = vst [vmem:[%s332 + $0x1c] sm:$0x1] %v357
      %v359 = vld [vmem:[%s332 + $0x20] sm:$0xf]
      %v360 = vsel %vm334, %v290, %v359
      %361 = vst [vmem:[%s332 + $0x20] sm:$0xf] %v360
      %v362 = vld [vmem:[%s332 + $0x24] sm:$0x1]
      %v363 = vsel %vm181, %v291, %v362
      %364 = vst [vmem:[%s332 + $0x24] sm:$0x1] %v363
      %v365 = vld [vmem:[%s332 + $0x28] sm:$0xf]
      %v366 = vsel %vm334, %v298, %v365
      %367 = vst [vmem:[%s332 + $0x28] sm:$0xf] %v366
      %v368 = vld [vmem:[%s332 + $0x2c] sm:$0x1]
      %v369 = vsel %vm181, %v299, %v368
      %370 = vst [vmem:[%s332 + $0x2c] sm:$0x1] %v369
      %v371 = vld [vmem:[%s332 + $0x30] sm:$0xf]
      %v372 = vsel %vm334, %v306, %v371
      %373 = vst [vmem:[%s332 + $0x30] sm:$0xf] %v372
      %v374 = vld [vmem:[%s332 + $0x34] sm:$0x1]
      %v375 = vsel %vm181, %v307, %v374
      %376 = vst [vmem:[%s332 + $0x34] sm:$0x1] %v375
      %v377 = vld [vmem:[%s332 + $0x38] sm:$0xf]
      %v378 = vsel %vm334, %v314, %v377
      %379 = vst [vmem:[%s332 + $0x38] sm:$0xf] %v378
      %v380 = vld [vmem:[%s332 + $0x3c] sm:$0x1]
      %v381 = vsel %vm181, %v315, %v380
      %382 = vst [vmem:[%s332 + $0x3c] sm:$0x1] %v381
      %v383 = vld [vmem:[%s332] sm:$0xf]
      %v384 = vld [vmem:[%s332 + $0x4] sm:$0x1]
      %v385 = vld [vmem:[%s332 + $0x8] sm:$0xf]
      %v386 = vld [vmem:[%s332 + $0xc] sm:$0x1]
      %v387 = vld [vmem:[%s332 + $0x10] sm:$0xf]
      %v388 = vld [vmem:[%s332 + $0x14] sm:$0x1]
      %v389 = vld [vmem:[%s332 + $0x18] sm:$0xf]
      %v390 = vld [vmem:[%s332 + $0x1c] sm:$0x1]
      %v391 = vld [vmem:[%s332 + $0x20] sm:$0xf]
      %v392 = vld [vmem:[%s332 + $0x24] sm:$0x1]
      %v393 = vld [vmem:[%s332 + $0x28] sm:$0xf]
      %v394 = vld [vmem:[%s332 + $0x2c] sm:$0x1]
      %v395 = vld [vmem:[%s332 + $0x30] sm:$0xf]
      %v396 = vld [vmem:[%s332 + $0x34] sm:$0x1]
      %v397 = vld [vmem:[%s332 + $0x38] sm:$0xf]
      %v398 = vld [vmem:[%s332 + $0x3c] sm:$0x1]
      %v399 = vld [vmem:[%s332 + $0x40] sm:$0xf]
      %v400 = vld [vmem:[%s332 + $0x44] sm:$0x1]
      %v401 = vld [vmem:[#allocation2] sm:$0xf]
      %v402 = vld [vmem:[#allocation2 + $0x4] sm:$0x1]
      %v403 = vld [vmem:[#allocation2 + $0x8] sm:$0xf]
      %v404 = vld [vmem:[#allocation2 + $0xc] sm:$0x1]
      %v405 = vld [vmem:[#allocation2 + $0x10] sm:$0xf]
      %v406 = vld [vmem:[#allocation2 + $0x14] sm:$0x1]
      %v407 = vld [vmem:[#allocation2 + $0x18] sm:$0xf]
      %v408 = vld [vmem:[#allocation2 + $0x1c] sm:$0x1]
      %v409 = vld [vmem:[#allocation2 + $0x20] sm:$0xf]
      %v410 = vld [vmem:[#allocation2 + $0x24] sm:$0x1]
      %v411 = vld [vmem:[#allocation2 + $0x28] sm:$0xf]
      %v412 = vld [vmem:[#allocation2 + $0x2c] sm:$0x1]
      %v413 = vld [vmem:[#allocation2 + $0x30] sm:$0xf]
      %v414 = vld [vmem:[#allocation2 + $0x34] sm:$0x1]
      %v415 = vld [vmem:[#allocation2 + $0x38] sm:$0xf]
      %v416 = vld [vmem:[#allocation2 + $0x3c] sm:$0x1]
      %v417 = vld [vmem:[#allocation2 + $0x40] sm:$0xf]
      %v418 = vld [vmem:[#allocation2 + $0x44] sm:$0x1]
      %v437 = vunpack.c.l.b16 %v383
      %v438 = vunpack.c.l.b16 %v384
      %v439 = vunpack.c.l.b16 %v385
      %v440 = vunpack.c.l.b16 %v386
      %v441 = vunpack.c.l.b16 %v387
      %v442 = vunpack.c.l.b16 %v388
      %v443 = vunpack.c.l.b16 %v389
      %v444 = vunpack.c.l.b16 %v390
      %v445 = vunpack.c.l.b16 %v391
      %v446 = vunpack.c.l.b16 %v392
      %v447 = vunpack.c.l.b16 %v393
      %v448 = vunpack.c.l.b16 %v394
      %v449 = vunpack.c.l.b16 %v395
      %v450 = vunpack.c.l.b16 %v396
      %v451 = vunpack.c.l.b16 %v397
      %v452 = vunpack.c.l.b16 %v398
      %v453 = vunpack.c.l.b16 %v399
      %v454 = vunpack.c.l.b16 %v400
      %v455 = vpack.c.b16 %v438, %v437
      %v456 = vpack.c.b16 %v440, %v439
      %v457 = vpack.c.b16 %v442, %v441
      %v458 = vpack.c.b16 %v444, %v443
      %v459 = vpack.c.b16 %v446, %v445
      %v460 = vpack.c.b16 %v448, %v447
      %v461 = vpack.c.b16 %v450, %v449
      %v462 = vpack.c.b16 %v452, %v451
      %v463 = vpack.c.b16 %v454, %v453
      %v482 = vunpack.c.l.b16 %v401
      %v483 = vunpack.c.l.b16 %v402
      %v484 = vunpack.c.l.b16 %v403
      %v485 = vunpack.c.l.b16 %v404
      %v486 = vunpack.c.l.b16 %v405
      %v487 = vunpack.c.l.b16 %v406
      %v488 = vunpack.c.l.b16 %v407
      %v489 = vunpack.c.l.b16 %v408
      %v490 = vunpack.c.l.b16 %v409
      %v491 = vunpack.c.l.b16 %v410
      %v492 = vunpack.c.l.b16 %v411
      %v493 = vunpack.c.l.b16 %v412
      %v494 = vunpack.c.l.b16 %v413
      %v495 = vunpack.c.l.b16 %v414
      %v496 = vunpack.c.l.b16 %v415
      %v497 = vunpack.c.l.b16 %v416
      %v498 = vunpack.c.l.b16 %v417
      %v499 = vunpack.c.l.b16 %v418
      %v500 = vpack.c.b16 %v483, %v482
      %v501 = vpack.c.b16 %v485, %v484
      %v502 = vpack.c.b16 %v487, %v486
      %v503 = vpack.c.b16 %v489, %v488
      %v504 = vpack.c.b16 %v491, %v490
      %v505 = vpack.c.b16 %v493, %v492
      %v506 = vpack.c.b16 %v495, %v494
      %v507 = vpack.c.b16 %v497, %v496
      %v508 = vpack.c.b16 %v499, %v498
      %509 = vrot.lane.b32.xlu0 %v500, 4
      %v510 = vpop.permute.xlu0 %509
      %511 = vrot.lane.b32.xlu0 %v501, 4
      %v512 = vpop.permute.xlu0 %511
      %513 = vrot.lane.b32.xlu0 %v502, 4
      %v514 = vpop.permute.xlu0 %513
      %515 = vrot.lane.b32.xlu0 %v503, 4
      %v516 = vpop.permute.xlu0 %515
      %517 = vrot.lane.b32.xlu0 %v504, 4
      %v518 = vpop.permute.xlu0 %517
      %519 = vrot.lane.b32.xlu0 %v505, 4
      %v520 = vpop.permute.xlu0 %519
      %521 = vrot.lane.b32.xlu0 %v506, 4
      %v522 = vpop.permute.xlu0 %521
      %523 = vrot.lane.b32.xlu0 %v507, 4
      %v524 = vpop.permute.xlu0 %523
      %525 = vrot.lane.b32.xlu0 %v508, 4
      %v526 = vpop.permute.xlu0 %525
      %v528 = vshrl.u32 %v455, 16
      %v530 = vrot.slane %v528, 7
      %v531 = vshll.u32 %v455, 16
      %v533 = vor.u32 %v530, %v531
      %v535 = vshrl.u32 %v456, 16
      %v537 = vrot.slane %v535, 7
      %v538 = vshll.u32 %v456, 16
      %v540 = vor.u32 %v537, %v538
      %v542 = vshrl.u32 %v457, 16
      %v544 = vrot.slane %v542, 7
      %v545 = vshll.u32 %v457, 16
      %v547 = vor.u32 %v544, %v545
      %v549 = vshrl.u32 %v458, 16
      %v551 = vrot.slane %v549, 7
      %v552 = vshll.u32 %v458, 16
      %v554 = vor.u32 %v551, %v552
      %v556 = vshrl.u32 %v459, 16
      %v558 = vrot.slane %v556, 7
      %v559 = vshll.u32 %v459, 16
      %v561 = vor.u32 %v558, %v559
      %v563 = vshrl.u32 %v460, 16
      %v565 = vrot.slane %v563, 7
      %v566 = vshll.u32 %v460, 16
      %v568 = vor.u32 %v565, %v566
      %v570 = vshrl.u32 %v461, 16
      %v572 = vrot.slane %v570, 7
      %v573 = vshll.u32 %v461, 16
      %v575 = vor.u32 %v572, %v573
      %v577 = vshrl.u32 %v462, 16
      %v579 = vrot.slane %v577, 7
      %v580 = vshll.u32 %v462, 16
      %v582 = vor.u32 %v579, %v580
      %v584 = vshrl.u32 %v463, 16
      %v586 = vrot.slane %v584, 7
      %v587 = vshll.u32 %v463, 16
      %v589 = vor.u32 %v586, %v587
      %590 = vrot.lane.b32.xlu0 %v533, 8
      %v591 = vpop.permute.xlu0 %590
      %592 = vrot.lane.b32.xlu0 %v540, 8
      %v593 = vpop.permute.xlu0 %592
      %594 = vrot.lane.b32.xlu0 %v547, 8
      %v595 = vpop.permute.xlu0 %594
      %596 = vrot.lane.b32.xlu0 %v554, 8
      %v597 = vpop.permute.xlu0 %596
      %598 = vrot.lane.b32.xlu0 %v561, 8
      %v599 = vpop.permute.xlu0 %598
      %600 = vrot.lane.b32.xlu0 %v568, 8
      %v601 = vpop.permute.xlu0 %600
      %602 = vrot.lane.b32.xlu0 %v575, 8
      %v603 = vpop.permute.xlu0 %602
      %604 = vrot.lane.b32.xlu0 %v582, 8
      %v605 = vpop.permute.xlu0 %604
      %606 = vrot.lane.b32.xlu0 %v589, 8
      %v607 = vpop.permute.xlu0 %606
      %v609 = vshrl.u32 %v500, 16
      %v611 = vrot.slane %v609, 7
      %v612 = vshll.u32 %v500, 16
      %v614 = vor.u32 %v611, %v612
      %v616 = vshrl.u32 %v501, 16
      %v618 = vrot.slane %v616, 7
      %v619 = vshll.u32 %v501, 16
      %v621 = vor.u32 %v618, %v619
      %v623 = vshrl.u32 %v502, 16
      %v625 = vrot.slane %v623, 7
      %v626 = vshll.u32 %v502, 16
      %v628 = vor.u32 %v625, %v626
      %v630 = vshrl.u32 %v503, 16
      %v632 = vrot.slane %v630, 7
      %v633 = vshll.u32 %v503, 16
      %v635 = vor.u32 %v632, %v633
      %v637 = vshrl.u32 %v504, 16
      %v639 = vrot.slane %v637, 7
      %v640 = vshll.u32 %v504, 16
      %v642 = vor.u32 %v639, %v640
      %v644 = vshrl.u32 %v505, 16
      %v646 = vrot.slane %v644, 7
      %v647 = vshll.u32 %v505, 16
      %v649 = vor.u32 %v646, %v647
      %v651 = vshrl.u32 %v506, 16
      %v653 = vrot.slane %v651, 7
      %v654 = vshll.u32 %v506, 16
      %v656 = vor.u32 %v653, %v654
      %v658 = vshrl.u32 %v507, 16
      %v660 = vrot.slane %v658, 7
      %v661 = vshll.u32 %v507, 16
      %v663 = vor.u32 %v660, %v661
      %v665 = vshrl.u32 %v508, 16
      %v667 = vrot.slane %v665, 7
      %v668 = vshll.u32 %v508, 16
      %v670 = vor.u32 %v667, %v668
      %671 = vrot.lane.b32.xlu0 %v614, 12
      %v672 = vpop.permute.xlu0 %671
      %673 = vrot.lane.b32.xlu0 %v621, 12
      %v674 = vpop.permute.xlu0 %673
      %675 = vrot.lane.b32.xlu0 %v628, 12
      %v676 = vpop.permute.xlu0 %675
      %677 = vrot.lane.b32.xlu0 %v635, 12
      %v678 = vpop.permute.xlu0 %677
      %679 = vrot.lane.b32.xlu0 %v642, 12
      %v680 = vpop.permute.xlu0 %679
      %681 = vrot.lane.b32.xlu0 %v649, 12
      %v682 = vpop.permute.xlu0 %681
      %683 = vrot.lane.b32.xlu0 %v656, 12
      %v684 = vpop.permute.xlu0 %683
      %685 = vrot.lane.b32.xlu0 %v663, 12
      %v686 = vpop.permute.xlu0 %685
      %687 = vrot.lane.b32.xlu0 %v670, 12
      %v688 = vpop.permute.xlu0 %687
      %vm689 = vcmask 31744
      %v691 = vsel %vm689, %v455, %v510
      %v693 = vsel %vm689, %v456, %v512
      %v695 = vsel %vm689, %v457, %v514
      %v697 = vsel %vm689, %v458, %v516
      %v699 = vsel %vm689, %v459, %v518
      %v701 = vsel %vm689, %v460, %v520
      %v703 = vsel %vm689, %v461, %v522
      %v705 = vsel %vm689, %v462, %v524
      %v707 = vsel %vm689, %v463, %v526
      %vm708 = vcmask 64512
      %v710 = vsel %vm708, %v691, %v591
      %v712 = vsel %vm708, %v693, %v593
      %v714 = vsel %vm708, %v695, %v595
      %v716 = vsel %vm708, %v697, %v597
      %v718 = vsel %vm708, %v699, %v599
      %v720 = vsel %vm708, %v701, %v601
      %v722 = vsel %vm708, %v703, %v603
      %v724 = vsel %vm708, %v705, %v605
      %v726 = vsel %vm708, %v707, %v607
      %vm727 = vcmask 97280
      %v729 = vsel %vm727, %v710, %v672
      %v731 = vsel %vm727, %v712, %v674
      %v733 = vsel %vm727, %v714, %v676
      %v735 = vsel %vm727, %v716, %v678
      %v737 = vsel %vm727, %v718, %v680
      %v739 = vsel %vm727, %v720, %v682
      %v741 = vsel %vm727, %v722, %v684
      %v743 = vsel %vm727, %v724, %v686
      %v745 = vsel %vm727, %v726, %v688
      %v755 = vcombine.high %v729, %v729
      %v757 = vunpack.c.l.s4 1966171168
      %v758 = vunpack.c.0.s8 %v757
      %v759 = vlaneseq
      %v760 = vshrl.u32 %v759, 7
      %v761 = vsub.s32 %v758, %v760
      %v762 = vrot.slane %v729, %v761
      %v764 = vunpack.c.l.s4 1966171168
      %v765 = vunpack.c.0.s8 %v764
      %v766 = vlaneseq
      %v767 = vshrl.u32 %v766, 7
      %v768 = vsub.s32 %v765, %v767
      %v769 = vrot.slane %v755, %v768
      %v770 = vcombine.high %v762, %v762
      %v772 = vunpack.c.l.s4 1966171168
      %v773 = vunpack.c.0.s8 %v772
      %v774 = vlaneseq
      %v775 = vshrl.u32 %v774, 7
      %v776 = vsub.s32 %v773, %v775
      %v777 = vrot.slane %v762, %v776
      %v779 = vunpack.c.l.s4 1966171168
      %v780 = vunpack.c.0.s8 %v779
      %v781 = vlaneseq
      %v782 = vshrl.u32 %v781, 7
      %v783 = vsub.s32 %v780, %v782
      %v784 = vrot.slane %v769, %v783
      %v786 = vunpack.c.l.s4 1966171168
      %v787 = vunpack.c.0.s8 %v786
      %v788 = vlaneseq
      %v789 = vshrl.u32 %v788, 7
      %v790 = vsub.s32 %v787, %v789
      %v791 = vrot.slane %v770, %v790
      %v792 = vcombine.high %v777, %v777
      %v793 = vcombine.high %v791, %v791
      %v794 = vcombine.high %v731, %v731
      %v796 = vunpack.c.l.s4 1966171168
      %v797 = vunpack.c.0.s8 %v796
      %v798 = vlaneseq
      %v799 = vshrl.u32 %v798, 7
      %v800 = vsub.s32 %v797, %v799
      %v801 = vrot.slane %v731, %v800
      %v803 = vunpack.c.l.s4 1966171168
      %v804 = vunpack.c.0.s8 %v803
      %v805 = vlaneseq
      %v806 = vshrl.u32 %v805, 7
      %v807 = vsub.s32 %v804, %v806
      %v808 = vrot.slane %v794, %v807
      %v809 = vcombine.high %v801, %v801
      %v811 = vunpack.c.l.s4 1966171168
      %v812 = vunpack.c.0.s8 %v811
      %v813 = vlaneseq
      %v814 = vshrl.u32 %v813, 7
      %v815 = vsub.s32 %v812, %v814
      %v816 = vrot.slane %v801, %v815
      %v818 = vunpack.c.l.s4 1966171168
      %v819 = vunpack.c.0.s8 %v818
      %v820 = vlaneseq
      %v821 = vshrl.u32 %v820, 7
      %v822 = vsub.s32 %v819, %v821
      %v823 = vrot.slane %v808, %v822
      %v825 = vunpack.c.l.s4 1966171168
      %v826 = vunpack.c.0.s8 %v825
      %v827 = vlaneseq
      %v828 = vshrl.u32 %v827, 7
      %v829 = vsub.s32 %v826, %v828
      %v830 = vrot.slane %v809, %v829
      %v831 = vcombine.high %v816, %v816
      %v832 = vcombine.high %v830, %v830
      %v833 = vcombine.high %v733, %v733
      %v835 = vunpack.c.l.s4 1966171168
      %v836 = vunpack.c.0.s8 %v835
      %v837 = vlaneseq
      %v838 = vshrl.u32 %v837, 7
      %v839 = vsub.s32 %v836, %v838
      %v840 = vrot.slane %v733, %v839
      %v842 = vunpack.c.l.s4 1966171168
      %v843 = vunpack.c.0.s8 %v842
      %v844 = vlaneseq
      %v845 = vshrl.u32 %v844, 7
      %v846 = vsub.s32 %v843, %v845
      %v847 = vrot.slane %v833, %v846
      %v848 = vcombine.high %v840, %v840
      %v850 = vunpack.c.l.s4 1966171168
      %v851 = vunpack.c.0.s8 %v850
      %v852 = vlaneseq
      %v853 = vshrl.u32 %v852, 7
      %v854 = vsub.s32 %v851, %v853
      %v855 = vrot.slane %v840, %v854
      %v857 = vunpack.c.l.s4 1966171168
      %v858 = vunpack.c.0.s8 %v857
      %v859 = vlaneseq
      %v860 = vshrl.u32 %v859, 7
      %v861 = vsub.s32 %v858, %v860
      %v862 = vrot.slane %v847, %v861
      %v864 = vunpack.c.l.s4 1966171168
      %v865 = vunpack.c.0.s8 %v864
      %v866 = vlaneseq
      %v867 = vshrl.u32 %v866, 7
      %v868 = vsub.s32 %v865, %v867
      %v869 = vrot.slane %v848, %v868
      %v870 = vcombine.high %v855, %v855
      %v871 = vcombine.high %v869, %v869
      %v872 = vcombine.high %v735, %v735
      %v874 = vunpack.c.l.s4 1966171168
      %v875 = vunpack.c.0.s8 %v874
      %v876 = vlaneseq
      %v877 = vshrl.u32 %v876, 7
      %v878 = vsub.s32 %v875, %v877
      %v879 = vrot.slane %v735, %v878
      %v881 = vunpack.c.l.s4 1966171168
      %v882 = vunpack.c.0.s8 %v881
      %v883 = vlaneseq
      %v884 = vshrl.u32 %v883, 7
      %v885 = vsub.s32 %v882, %v884
      %v886 = vrot.slane %v872, %v885
      %v887 = vcombine.high %v879, %v879
      %v889 = vunpack.c.l.s4 1966171168
      %v890 = vunpack.c.0.s8 %v889
      %v891 = vlaneseq
      %v892 = vshrl.u32 %v891, 7
      %v893 = vsub.s32 %v890, %v892
      %v894 = vrot.slane %v879, %v893
      %v896 = vunpack.c.l.s4 1966171168
      %v897 = vunpack.c.0.s8 %v896
      %v898 = vlaneseq
      %v899 = vshrl.u32 %v898, 7
      %v900 = vsub.s32 %v897, %v899
      %v901 = vrot.slane %v886, %v900
      %v903 = vunpack.c.l.s4 1966171168
      %v904 = vunpack.c.0.s8 %v903
      %v905 = vlaneseq
      %v906 = vshrl.u32 %v905, 7
      %v907 = vsub.s32 %v904, %v906
      %v908 = vrot.slane %v887, %v907
      %v909 = vcombine.high %v894, %v894
      %v910 = vcombine.high %v908, %v908
      %v911 = vcombine.high %v737, %v737
      %v913 = vunpack.c.l.s4 1966171168
      %v914 = vunpack.c.0.s8 %v913
      %v915 = vlaneseq
      %v916 = vshrl.u32 %v915, 7
      %v917 = vsub.s32 %v914, %v916
      %v918 = vrot.slane %v737, %v917
      %v920 = vunpack.c.l.s4 1966171168
      %v921 = vunpack.c.0.s8 %v920
      %v922 = vlaneseq
      %v923 = vshrl.u32 %v922, 7
      %v924 = vsub.s32 %v921, %v923
      %v925 = vrot.slane %v911, %v924
      %v926 = vcombine.high %v918, %v918
      %v928 = vunpack.c.l.s4 1966171168
      %v929 = vunpack.c.0.s8 %v928
      %v930 = vlaneseq
      %v931 = vshrl.u32 %v930, 7
      %v932 = vsub.s32 %v929, %v931
      %v933 = vrot.slane %v918, %v932
      %v935 = vunpack.c.l.s4 1966171168
      %v936 = vunpack.c.0.s8 %v935
      %v937 = vlaneseq
      %v938 = vshrl.u32 %v937, 7
      %v939 = vsub.s32 %v936, %v938
      %v940 = vrot.slane %v925, %v939
      %v942 = vunpack.c.l.s4 1966171168
      %v943 = vunpack.c.0.s8 %v942
      %v944 = vlaneseq
      %v945 = vshrl.u32 %v944, 7
      %v946 = vsub.s32 %v943, %v945
      %v947 = vrot.slane %v926, %v946
      %v948 = vcombine.high %v933, %v933
      %v949 = vcombine.high %v947, %v947
      %v950 = vcombine.high %v739, %v739
      %v952 = vunpack.c.l.s4 1966171168
      %v953 = vunpack.c.0.s8 %v952
      %v954 = vlaneseq
      %v955 = vshrl.u32 %v954, 7
      %v956 = vsub.s32 %v953, %v955
      %v957 = vrot.slane %v739, %v956
      %v959 = vunpack.c.l.s4 1966171168
      %v960 = vunpack.c.0.s8 %v959
      %v961 = vlaneseq
      %v962 = vshrl.u32 %v961, 7
      %v963 = vsub.s32 %v960, %v962
      %v964 = vrot.slane %v950, %v963
      %v965 = vcombine.high %v957, %v957
      %v967 = vunpack.c.l.s4 1966171168
      %v968 = vunpack.c.0.s8 %v967
      %v969 = vlaneseq
      %v970 = vshrl.u32 %v969, 7
      %v971 = vsub.s32 %v968, %v970
      %v972 = vrot.slane %v957, %v971
      %v974 = vunpack.c.l.s4 1966171168
      %v975 = vunpack.c.0.s8 %v974
      %v976 = vlaneseq
      %v977 = vshrl.u32 %v976, 7
      %v978 = vsub.s32 %v975, %v977
      %v979 = vrot.slane %v964, %v978
      %v981 = vunpack.c.l.s4 1966171168
      %v982 = vunpack.c.0.s8 %v981
      %v983 = vlaneseq
      %v984 = vshrl.u32 %v983, 7
      %v985 = vsub.s32 %v982, %v984
      %v986 = vrot.slane %v965, %v985
      %v987 = vcombine.high %v972, %v972
      %v988 = vcombine.high %v986, %v986
      %v989 = vcombine.high %v741, %v741
      %v991 = vunpack.c.l.s4 1966171168
      %v992 = vunpack.c.0.s8 %v991
      %v993 = vlaneseq
      %v994 = vshrl.u32 %v993, 7
      %v995 = vsub.s32 %v992, %v994
      %v996 = vrot.slane %v741, %v995
      %v998 = vunpack.c.l.s4 1966171168
      %v999 = vunpack.c.0.s8 %v998
      %v1000 = vlaneseq
      %v1001 = vshrl.u32 %v1000, 7
      %v1002 = vsub.s32 %v999, %v1001
      %v1003 = vrot.slane %v989, %v1002
      %v1004 = vcombine.high %v996, %v996
      %v1006 = vunpack.c.l.s4 1966171168
      %v1007 = vunpack.c.0.s8 %v1006
      %v1008 = vlaneseq
      %v1009 = vshrl.u32 %v1008, 7
      %v1010 = vsub.s32 %v1007, %v1009
      %v1011 = vrot.slane %v996, %v1010
      %v1013 = vunpack.c.l.s4 1966171168
      %v1014 = vunpack.c.0.s8 %v1013
      %v1015 = vlaneseq
      %v1016 = vshrl.u32 %v1015, 7
      %v1017 = vsub.s32 %v1014, %v1016
      %v1018 = vrot.slane %v1003, %v1017
      %v1020 = vunpack.c.l.s4 1966171168
      %v1021 = vunpack.c.0.s8 %v1020
      %v1022 = vlaneseq
      %v1023 = vshrl.u32 %v1022, 7
      %v1024 = vsub.s32 %v1021, %v1023
      %v1025 = vrot.slane %v1004, %v1024
      %v1026 = vcombine.high %v1011, %v1011
      %v1027 = vcombine.high %v1025, %v1025
      %v1028 = vcombine.high %v743, %v743
      %v1030 = vunpack.c.l.s4 1966171168
      %v1031 = vunpack.c.0.s8 %v1030
      %v1032 = vlaneseq
      %v1033 = vshrl.u32 %v1032, 7
      %v1034 = vsub.s32 %v1031, %v1033
      %v1035 = vrot.slane %v743, %v1034
      %v1037 = vunpack.c.l.s4 1966171168
      %v1038 = vunpack.c.0.s8 %v1037
      %v1039 = vlaneseq
      %v1040 = vshrl.u32 %v1039, 7
      %v1041 = vsub.s32 %v1038, %v1040
      %v1042 = vrot.slane %v1028, %v1041
      %v1043 = vcombine.high %v1035, %v1035
      %v1045 = vunpack.c.l.s4 1966171168
      %v1046 = vunpack.c.0.s8 %v1045
      %v1047 = vlaneseq
      %v1048 = vshrl.u32 %v1047, 7
      %v1049 = vsub.s32 %v1046, %v1048
      %v1050 = vrot.slane %v1035, %v1049
      %v1052 = vunpack.c.l.s4 1966171168
      %v1053 = vunpack.c.0.s8 %v1052
      %v1054 = vlaneseq
      %v1055 = vshrl.u32 %v1054, 7
      %v1056 = vsub.s32 %v1053, %v1055
      %v1057 = vrot.slane %v1042, %v1056
      %v1059 = vunpack.c.l.s4 1966171168
      %v1060 = vunpack.c.0.s8 %v1059
      %v1061 = vlaneseq
      %v1062 = vshrl.u32 %v1061, 7
      %v1063 = vsub.s32 %v1060, %v1062
      %v1064 = vrot.slane %v1043, %v1063
      %v1065 = vcombine.high %v1050, %v1050
      %v1066 = vcombine.high %v1064, %v1064
      %v1067 = vcombine.high %v745, %v745
      %v1069 = vunpack.c.l.s4 1966171168
      %v1070 = vunpack.c.0.s8 %v1069
      %v1071 = vlaneseq
      %v1072 = vshrl.u32 %v1071, 7
      %v1073 = vsub.s32 %v1070, %v1072
      %v1074 = vrot.slane %v745, %v1073
      %v1076 = vunpack.c.l.s4 1966171168
      %v1077 = vunpack.c.0.s8 %v1076
      %v1078 = vlaneseq
      %v1079 = vshrl.u32 %v1078, 7
      %v1080 = vsub.s32 %v1077, %v1079
      %v1081 = vrot.slane %v1067, %v1080
      %v1082 = vcombine.high %v1074, %v1074
      %v1084 = vunpack.c.l.s4 1966171168
      %v1085 = vunpack.c.0.s8 %v1084
      %v1086 = vlaneseq
      %v1087 = vshrl.u32 %v1086, 7
      %v1088 = vsub.s32 %v1085, %v1087
      %v1089 = vrot.slane %v1074, %v1088
      %v1091 = vunpack.c.l.s4 1966171168
      %v1092 = vunpack.c.0.s8 %v1091
      %v1093 = vlaneseq
      %v1094 = vshrl.u32 %v1093, 7
      %v1095 = vsub.s32 %v1092, %v1094
      %v1096 = vrot.slane %v1081, %v1095
      %v1098 = vunpack.c.l.s4 1966171168
      %v1099 = vunpack.c.0.s8 %v1098
      %v1100 = vlaneseq
      %v1101 = vshrl.u32 %v1100, 7
      %v1102 = vsub.s32 %v1099, %v1101
      %v1103 = vrot.slane %v1082, %v1102
      %v1104 = vcombine.high %v1089, %v1089
      %v1105 = vcombine.high %v1103, %v1103
      %v1106 = vunpack.i.h.s16 %v777
      %v1107 = vunpack.i.l.s16 %v791
      %v1108 = vunpack.i.h.s16 %v791
      %v1109 = vunpack.i.l.s16 %v792
      %v1110 = vunpack.i.h.s16 %v792
      %v1111 = vunpack.i.l.s16 %v793
      %v1112 = vunpack.i.h.s16 %v793
      %v1113 = vunpack.i.l.s16 %v784
      %v1114 = vunpack.i.h.s16 %v784
      %v1115 = vunpack.i.h.s16 %v816
      %v1116 = vunpack.i.l.s16 %v830
      %v1117 = vunpack.i.h.s16 %v830
      %v1118 = vunpack.i.l.s16 %v831
      %v1119 = vunpack.i.h.s16 %v831
      %v1120 = vunpack.i.l.s16 %v832
      %v1121 = vunpack.i.h.s16 %v832
      %v1122 = vunpack.i.l.s16 %v823
      %v1123 = vunpack.i.h.s16 %v823
      %v1124 = vunpack.i.h.s16 %v855
      %v1125 = vunpack.i.l.s16 %v869
      %v1126 = vunpack.i.h.s16 %v869
      %v1127 = vunpack.i.l.s16 %v870
      %v1128 = vunpack.i.h.s16 %v870
      %v1129 = vunpack.i.l.s16 %v871
      %v1130 = vunpack.i.h.s16 %v871
      %v1131 = vunpack.i.l.s16 %v862
      %v1132 = vunpack.i.h.s16 %v862
      %v1133 = vunpack.i.h.s16 %v894
      %v1134 = vunpack.i.l.s16 %v908
      %v1135 = vunpack.i.h.s16 %v908
      %v1136 = vunpack.i.l.s16 %v909
      %v1137 = vunpack.i.h.s16 %v909
      %v1138 = vunpack.i.l.s16 %v910
      %v1139 = vunpack.i.h.s16 %v910
      %v1140 = vunpack.i.l.s16 %v901
      %v1141 = vunpack.i.h.s16 %v901
      %v1142 = vunpack.i.h.s16 %v933
      %v1143 = vunpack.i.l.s16 %v947
      %v1144 = vunpack.i.h.s16 %v947
      %v1145 = vunpack.i.l.s16 %v948
      %v1146 = vunpack.i.h.s16 %v948
      %v1147 = vunpack.i.l.s16 %v949
      %v1148 = vunpack.i.h.s16 %v949
      %v1149 = vunpack.i.l.s16 %v940
      %v1150 = vunpack.i.h.s16 %v940
      %v1151 = vunpack.i.h.s16 %v972
      %v1152 = vunpack.i.l.s16 %v986
      %v1153 = vunpack.i.h.s16 %v986
      %v1154 = vunpack.i.l.s16 %v987
      %v1155 = vunpack.i.h.s16 %v987
      %v1156 = vunpack.i.l.s16 %v988
      %v1157 = vunpack.i.h.s16 %v988
      %v1158 = vunpack.i.l.s16 %v979
      %v1159 = vunpack.i.h.s16 %v979
      %v1160 = vunpack.i.h.s16 %v1011
      %v1161 = vunpack.i.l.s16 %v1025
      %v1162 = vunpack.i.h.s16 %v1025
      %v1163 = vunpack.i.l.s16 %v1026
      %v1164 = vunpack.i.h.s16 %v1026
      %v1165 = vunpack.i.l.s16 %v1027
      %v1166 = vunpack.i.h.s16 %v1027
      %v1167 = vunpack.i.l.s16 %v1018
      %v1168 = vunpack.i.h.s16 %v1018
      %v1169 = vunpack.i.h.s16 %v1050
      %v1170 = vunpack.i.l.s16 %v1064
      %v1171 = vunpack.i.h.s16 %v1064
      %v1172 = vunpack.i.l.s16 %v1065
      %v1173 = vunpack.i.h.s16 %v1065
      %v1174 = vunpack.i.l.s16 %v1066
      %v1175 = vunpack.i.h.s16 %v1066
      %v1176 = vunpack.i.l.s16 %v1057
      %v1177 = vunpack.i.h.s16 %v1057
      %v1178 = vunpack.i.h.s16 %v1089
      %v1179 = vunpack.i.l.s16 %v1103
      %v1180 = vunpack.i.h.s16 %v1103
      %v1181 = vunpack.i.l.s16 %v1104
      %v1182 = vunpack.i.h.s16 %v1104
      %v1183 = vunpack.i.l.s16 %v1105
      %v1184 = vunpack.i.h.s16 %v1105
      %v1185 = vunpack.i.l.s16 %v1096
      %v1186 = vunpack.i.h.s16 %v1096
      %v1187 = vld [vmem:[%s1] sm:$0xf]
      %v1188 = vld [vmem:[%s1 + $0x4] sm:$0xf]
      %v1189 = vld [vmem:[%s2] sm:$0x1]
      %v1191 = vlaneseq
      %v1192 = vshrl.u32 %v1191, 7
      %v1193 = vsub.s32 0, %v1192
      %v1194 = vrot.slane %v1189, %v1193
      %v1196 = vpack.i.b16 %v1107, %v1106
      %v1197 = vpack.i.b16 %v1109, %v1108
      %v1198 = vpack.i.b16 %v1111, %v1110
      %v1199 = vpack.i.b16 %v1113, %v1112
      %v1200 = vpack.i.b16 %v1115, %v1114
      %v1201 = vpack.i.b16 %v1117, %v1116
      %v1202 = vpack.i.b16 %v1119, %v1118
      %v1203 = vpack.i.b16 %v1121, %v1120
      %v1204 = vpack.i.b16 %v1123, %v1122
      %v1205 = vpack.i.b16 %v1125, %v1124
      %v1206 = vpack.i.b16 %v1127, %v1126
      %v1207 = vpack.i.b16 %v1129, %v1128
      %v1208 = vpack.i.b16 %v1131, %v1130
      %v1209 = vpack.i.b16 %v1133, %v1132
      %v1210 = vpack.i.b16 %v1135, %v1134
      %v1211 = vpack.i.b16 %v1137, %v1136
      %v1212 = vpack.i.b16 %v1139, %v1138
      %v1213 = vpack.i.b16 %v1141, %v1140
      %v1214 = vpack.i.b16 %v1143, %v1142
      %v1215 = vpack.i.b16 %v1145, %v1144
      %v1216 = vpack.i.b16 %v1147, %v1146
      %v1217 = vpack.i.b16 %v1149, %v1148
      %v1218 = vpack.i.b16 %v1151, %v1150
      %v1219 = vpack.i.b16 %v1153, %v1152
      %v1220 = vpack.i.b16 %v1155, %v1154
      %v1221 = vpack.i.b16 %v1157, %v1156
      %v1222 = vpack.i.b16 %v1159, %v1158
      %v1223 = vpack.i.b16 %v1161, %v1160
      %v1224 = vpack.i.b16 %v1163, %v1162
      %v1225 = vpack.i.b16 %v1165, %v1164
      %v1226 = vpack.i.b16 %v1167, %v1166
      %v1227 = vpack.i.b16 %v1169, %v1168
      %v1228 = vpack.i.b16 %v1171, %v1170
      %v1229 = vpack.i.b16 %v1173, %v1172
      %v1230 = vpack.i.b16 %v1175, %v1174
      %v1231 = vpack.i.b16 %v1177, %v1176
      %v1232 = vpack.i.b16 %v1179, %v1178
      %v1233 = vpack.i.b16 %v1181, %v1180
      %v1234 = vpack.i.b16 %v1183, %v1182
      %v1235 = vpack.i.b16 %v1185, %v1184
      %v1237 = vcombine.low %v1196, %v1197
      %v1238 = vcombine.low %v1198, %v1199
      %v1239 = vcombine.low %v1200, %v1201
      %v1240 = vcombine.low %v1202, %v1203
      %v1242 = vunpack.c.l.s4 1966171168
      %v1243 = vunpack.c.0.s8 %v1242
      %v1244 = vlaneseq
      %v1245 = vshrl.u32 %v1244, 7
      %v1246 = vsub.s32 %v1243, %v1245
      %v1247 = vrot.slane %v1237, %v1246
      %v1249 = vunpack.c.l.s4 1966171168
      %v1250 = vunpack.c.0.s8 %v1249
      %v1251 = vlaneseq
      %v1252 = vshrl.u32 %v1251, 7
      %v1253 = vsub.s32 %v1250, %v1252
      %v1254 = vrot.slane %v1238, %v1253
      %v1256 = vunpack.c.l.s4 1966171168
      %v1257 = vunpack.c.0.s8 %v1256
      %v1258 = vlaneseq
      %v1259 = vshrl.u32 %v1258, 7
      %v1260 = vsub.s32 %v1257, %v1259
      %v1261 = vrot.slane %v1239, %v1260
      %v1263 = vunpack.c.l.s4 1966171168
      %v1264 = vunpack.c.0.s8 %v1263
      %v1265 = vlaneseq
      %v1266 = vshrl.u32 %v1265, 7
      %v1267 = vsub.s32 %v1264, %v1266
      %v1268 = vrot.slane %v1240, %v1267
      %v1269 = vcombine.low %v1247, %v1254
      %v1270 = vcombine.low %v1261, %v1268
      %v1272 = vunpack.c.l.s4 1966171168
      %v1273 = vunpack.c.0.s8 %v1272
      %v1274 = vlaneseq
      %v1275 = vshrl.u32 %v1274, 7
      %v1276 = vsub.s32 %v1273, %v1275
      %v1277 = vrot.slane %v1269, %v1276
      %v1279 = vunpack.c.l.s4 1966171168
      %v1280 = vunpack.c.0.s8 %v1279
      %v1281 = vlaneseq
      %v1282 = vshrl.u32 %v1281, 7
      %v1283 = vsub.s32 %v1280, %v1282
      %v1284 = vrot.slane %v1270, %v1283
      %v1285 = vcombine.low %v1277, %v1284
      %v1286 = vcombine.low %v1204, %v1205
      %v1287 = vcombine.low %v1206, %v1207
      %v1288 = vcombine.low %v1208, %v1209
      %v1289 = vcombine.low %v1210, %v1211
      %v1291 = vunpack.c.l.s4 1966171168
      %v1292 = vunpack.c.0.s8 %v1291
      %v1293 = vlaneseq
      %v1294 = vshrl.u32 %v1293, 7
      %v1295 = vsub.s32 %v1292, %v1294
      %v1296 = vrot.slane %v1286, %v1295
      %v1298 = vunpack.c.l.s4 1966171168
      %v1299 = vunpack.c.0.s8 %v1298
      %v1300 = vlaneseq
      %v1301 = vshrl.u32 %v1300, 7
      %v1302 = vsub.s32 %v1299, %v1301
      %v1303 = vrot.slane %v1287, %v1302
      %v1305 = vunpack.c.l.s4 1966171168
      %v1306 = vunpack.c.0.s8 %v1305
      %v1307 = vlaneseq
      %v1308 = vshrl.u32 %v1307, 7
      %v1309 = vsub.s32 %v1306, %v1308
      %v1310 = vrot.slane %v1288, %v1309
      %v1312 = vunpack.c.l.s4 1966171168
      %v1313 = vunpack.c.0.s8 %v1312
      %v1314 = vlaneseq
      %v1315 = vshrl.u32 %v1314, 7
      %v1316 = vsub.s32 %v1313, %v1315
      %v1317 = vrot.slane %v1289, %v1316
      %v1318 = vcombine.low %v1296, %v1303
      %v1319 = vcombine.low %v1310, %v1317
      %v1321 = vunpack.c.l.s4 1966171168
      %v1322 = vunpack.c.0.s8 %v1321
      %v1323 = vlaneseq
      %v1324 = vshrl.u32 %v1323, 7
      %v1325 = vsub.s32 %v1322, %v1324
      %v1326 = vrot.slane %v1318, %v1325
      %v1328 = vunpack.c.l.s4 1966171168
      %v1329 = vunpack.c.0.s8 %v1328
      %v1330 = vlaneseq
      %v1331 = vshrl.u32 %v1330, 7
      %v1332 = vsub.s32 %v1329, %v1331
      %v1333 = vrot.slane %v1319, %v1332
      %v1334 = vcombine.low %v1326, %v1333
      %v1335 = vcombine.low %v1212, %v1213
      %v1336 = vcombine.low %v1214, %v1215
      %v1337 = vcombine.low %v1216, %v1217
      %v1338 = vcombine.low %v1218, %v1219
      %v1340 = vunpack.c.l.s4 1966171168
      %v1341 = vunpack.c.0.s8 %v1340
      %v1342 = vlaneseq
      %v1343 = vshrl.u32 %v1342, 7
      %v1344 = vsub.s32 %v1341, %v1343
      %v1345 = vrot.slane %v1335, %v1344
      %v1347 = vunpack.c.l.s4 1966171168
      %v1348 = vunpack.c.0.s8 %v1347
      %v1349 = vlaneseq
      %v1350 = vshrl.u32 %v1349, 7
      %v1351 = vsub.s32 %v1348, %v1350
      %v1352 = vrot.slane %v1336, %v1351
      %v1354 = vunpack.c.l.s4 1966171168
      %v1355 = vunpack.c.0.s8 %v1354
      %v1356 = vlaneseq
      %v1357 = vshrl.u32 %v1356, 7
      %v1358 = vsub.s32 %v1355, %v1357
      %v1359 = vrot.slane %v1337, %v1358
      %v1361 = vunpack.c.l.s4 1966171168
      %v1362 = vunpack.c.0.s8 %v1361
      %v1363 = vlaneseq
      %v1364 = vshrl.u32 %v1363, 7
      %v1365 = vsub.s32 %v1362, %v1364
      %v1366 = vrot.slane %v1338, %v1365
      %v1367 = vcombine.low %v1345, %v1352
      %v1368 = vcombine.low %v1359, %v1366
      %v1370 = vunpack.c.l.s4 1966171168
      %v1371 = vunpack.c.0.s8 %v1370
      %v1372 = vlaneseq
      %v1373 = vshrl.u32 %v1372, 7
      %v1374 = vsub.s32 %v1371, %v1373
      %v1375 = vrot.slane %v1367, %v1374
      %v1377 = vunpack.c.l.s4 1966171168
      %v1378 = vunpack.c.0.s8 %v1377
      %v1379 = vlaneseq
      %v1380 = vshrl.u32 %v1379, 7
      %v1381 = vsub.s32 %v1378, %v1380
      %v1382 = vrot.slane %v1368, %v1381
      %v1383 = vcombine.low %v1375, %v1382
      %v1384 = vcombine.low %v1220, %v1221
      %v1385 = vcombine.low %v1222, %v1223
      %v1386 = vcombine.low %v1224, %v1225
      %v1387 = vcombine.low %v1226, %v1227
      %v1389 = vunpack.c.l.s4 1966171168
      %v1390 = vunpack.c.0.s8 %v1389
      %v1391 = vlaneseq
      %v1392 = vshrl.u32 %v1391, 7
      %v1393 = vsub.s32 %v1390, %v1392
      %v1394 = vrot.slane %v1384, %v1393
      %v1396 = vunpack.c.l.s4 1966171168
      %v1397 = vunpack.c.0.s8 %v1396
      %v1398 = vlaneseq
      %v1399 = vshrl.u32 %v1398, 7
      %v1400 = vsub.s32 %v1397, %v1399
      %v1401 = vrot.slane %v1385, %v1400
      %v1403 = vunpack.c.l.s4 1966171168
      %v1404 = vunpack.c.0.s8 %v1403
      %v1405 = vlaneseq
      %v1406 = vshrl.u32 %v1405, 7
      %v1407 = vsub.s32 %v1404, %v1406
      %v1408 = vrot.slane %v1386, %v1407
      %v1410 = vunpack.c.l.s4 1966171168
      %v1411 = vunpack.c.0.s8 %v1410
      %v1412 = vlaneseq
      %v1413 = vshrl.u32 %v1412, 7
      %v1414 = vsub.s32 %v1411, %v1413
      %v1415 = vrot.slane %v1387, %v1414
      %v1416 = vcombine.low %v1394, %v1401
      %v1417 = vcombine.low %v1408, %v1415
      %v1419 = vunpack.c.l.s4 1966171168
      %v1420 = vunpack.c.0.s8 %v1419
      %v1421 = vlaneseq
      %v1422 = vshrl.u32 %v1421, 7
      %v1423 = vsub.s32 %v1420, %v1422
      %v1424 = vrot.slane %v1416, %v1423
      %v1426 = vunpack.c.l.s4 1966171168
      %v1427 = vunpack.c.0.s8 %v1426
      %v1428 = vlaneseq
      %v1429 = vshrl.u32 %v1428, 7
      %v1430 = vsub.s32 %v1427, %v1429
      %v1431 = vrot.slane %v1417, %v1430
      %v1432 = vcombine.low %v1424, %v1431
      %v1433 = vcombine.low %v1228, %v1229
      %v1434 = vcombine.low %v1230, %v1231
      %v1435 = vcombine.low %v1232, %v1233
      %v1436 = vcombine.low %v1234, %v1235
      %v1438 = vunpack.c.l.s4 1966171168
      %v1439 = vunpack.c.0.s8 %v1438
      %v1440 = vlaneseq
      %v1441 = vshrl.u32 %v1440, 7
      %v1442 = vsub.s32 %v1439, %v1441
      %v1443 = vrot.slane %v1433, %v1442
      %v1445 = vunpack.c.l.s4 1966171168
      %v1446 = vunpack.c.0.s8 %v1445
      %v1447 = vlaneseq
      %v1448 = vshrl.u32 %v1447, 7
      %v1449 = vsub.s32 %v1446, %v1448
      %v1450 = vrot.slane %v1434, %v1449
      %v1452 = vunpack.c.l.s4 1966171168
      %v1453 = vunpack.c.0.s8 %v1452
      %v1454 = vlaneseq
      %v1455 = vshrl.u32 %v1454, 7
      %v1456 = vsub.s32 %v1453, %v1455
      %v1457 = vrot.slane %v1435, %v1456
      %v1459 = vunpack.c.l.s4 1966171168
      %v1460 = vunpack.c.0.s8 %v1459
      %v1461 = vlaneseq
      %v1462 = vshrl.u32 %v1461, 7
      %v1463 = vsub.s32 %v1460, %v1462
      %v1464 = vrot.slane %v1436, %v1463
      %v1465 = vcombine.low %v1443, %v1450
      %v1466 = vcombine.low %v1457, %v1464
      %v1468 = vunpack.c.l.s4 1966171168
      %v1469 = vunpack.c.0.s8 %v1468
      %v1470 = vlaneseq
      %v1471 = vshrl.u32 %v1470, 7
      %v1472 = vsub.s32 %v1469, %v1471
      %v1473 = vrot.slane %v1465, %v1472
      %v1475 = vunpack.c.l.s4 1966171168
      %v1476 = vunpack.c.0.s8 %v1475
      %v1477 = vlaneseq
      %v1478 = vshrl.u32 %v1477, 7
      %v1479 = vsub.s32 %v1476, %v1478
      %v1480 = vrot.slane %v1466, %v1479
      %v1481 = vcombine.low %v1473, %v1480
      %v1483 = vunpack.c.l.s4 1966171168
      %v1484 = vunpack.c.0.s8 %v1483
      %v1485 = vlaneseq
      %v1486 = vshrl.u32 %v1485, 7
      %v1487 = vsub.s32 %v1484, %v1486
      %v1488 = vrot.slane %v1186, %v1487
      %v1490 = vunpack.c.l.s4 1966171168
      %v1491 = vunpack.c.0.s8 %v1490
      %v1492 = vlaneseq
      %v1493 = vshrl.u32 %v1492, 7
      %v1494 = vsub.s32 %v1491, %v1493
      %v1495 = vrot.slane %v1488, %v1494
      %v1498 = vunpack.c.l.b16 %v1187
      %v1499 = vunpack.c.l.b16 %v1188
      %v1500 = vpack.c.b16 %v1499, %v1498
      %vm1502 = vcmask 130048
      %v1504 = vsel %vm1502, %v1285, 0
      %v1507 = vsel %vm1502, %v1334, 0
      %v1510 = vsel %vm1502, %v1383, 0
      %v1513 = vsel %vm1502, %v1432, 0
      %v1516 = vsel %vm1502, %v1481, 0
      %v1519 = vsel %vm1502, %v1495, 0
      %1521 = vmatprep.subr.bf16.mxu0 0
      %1522 = vmatpush1.bf16.msra.mxu0 %v1500
      %1523 = vmatprep.subr.bf16.mxu0 0
      %1524 = vmatpush1.bf16.msra.mxu0 0
      %1525 = vmatprep.subr.bf16.mxu0 0
      %1526 = vmatpush1.bf16.msra.mxu0 0
      %1527 = vmatprep.subr.bf16.mxu0 0
      %1528 = vmatpush1.bf16.msra.mxu0 0
      %1529 = vmatprep.subr.bf16.mxu0 0
      %1530 = vmatpush1.bf16.msra.mxu0 0
      %1531 = vmatprep.subr.bf16.mxu0 0
      %1532 = vmatpush1.bf16.msra.mxu0 0
      %1533 = vmatprep.subr.bf16.mxu0 0
      %1534 = vmatpush1.bf16.msra.mxu0 0
      %1535 = vmatprep.subr.bf16.mxu0 0
      %1536 = vmatpush1.bf16.msra.mxu0 0
      %1537 = vmatprep.subr.bf16.mxu0 0
      %1538 = vmatpush1.bf16.msra.mxu0 0
      %1539 = vmatprep.subr.bf16.mxu0 0
      %1540 = vmatpush1.bf16.msra.mxu0 0
      %1541 = vmatprep.subr.bf16.mxu0 0
      %1542 = vmatpush1.bf16.msra.mxu0 0
      %1543 = vmatprep.subr.bf16.mxu0 0
      %1544 = vmatpush1.bf16.msra.mxu0 0
      %1545 = vmatprep.subr.bf16.mxu0 0
      %1546 = vmatpush1.bf16.msra.mxu0 0
      %1547 = vmatprep.subr.bf16.mxu0 0
      %1548 = vmatpush1.bf16.msra.mxu0 0
      %1549 = vmatprep.subr.bf16.mxu0 0
      %1550 = vmatpush1.bf16.msra.mxu0 0
      %1551 = vmatprep.subr.bf16.mxu0 0
      %1552 = vmatpush1.bf16.msra.mxu0 0
      %1553 = vmatprep.mubr.bf16.mxu0 0
      %1554 = vmatmul.mubr.bf16.gmra.mrb[0].mxu0 %v1504
      %v1555 = vpop.f32.mrb[0].mxu0
      %v1556 = vadd.f32 %v1194, %v1555
      %v1557 = vpop.f32.mrb[0].mxu0
      %v1558 = vpop.f32.mrb[0].mxu0
      %v1559 = vadd.f32 %v1194, %v1558
      %v1560 = vpop.f32.mrb[0].mxu0
      %1561 = vmatprep.mubr.bf16.mxu0 0
      %1562 = vmatmul.mubr.bf16.gmra.mrb[0].mxu0 %v1507
      %v1563 = vpop.f32.mrb[0].mxu0
      %v1564 = vadd.f32 %v1194, %v1563
      %v1565 = vpop.f32.mrb[0].mxu0
      %v1566 = vpop.f32.mrb[0].mxu0
      %v1567 = vadd.f32 %v1194, %v1566
      %v1568 = vpop.f32.mrb[0].mxu0
      %1569 = vmatprep.mubr.bf16.mxu0 0
      %1570 = vmatmul.mubr.bf16.gmra.mrb[0].mxu0 %v1510
      %v1571 = vpop.f32.mrb[0].mxu0
      %v1572 = vadd.f32 %v1194, %v1571
      %v1573 = vpop.f32.mrb[0].mxu0
      %v1574 = vpop.f32.mrb[0].mxu0
      %v1575 = vadd.f32 %v1194, %v1574
      %v1576 = vpop.f32.mrb[0].mxu0
      %1577 = vmatprep.mubr.bf16.mxu0 0
      %1578 = vmatmul.mubr.bf16.gmra.mrb[0].mxu0 %v1513
      %v1579 = vpop.f32.mrb[0].mxu0
      %v1580 = vadd.f32 %v1194, %v1579
      %v1581 = vpop.f32.mrb[0].mxu0
      %v1582 = vpop.f32.mrb[0].mxu0
      %v1583 = vadd.f32 %v1194, %v1582
      %v1584 = vpop.f32.mrb[0].mxu0
      %1585 = vmatprep.mubr.bf16.mxu0 0
      %1586 = vmatmul.mubr.bf16.gmra.mrb[0].mxu0 %v1516
      %v1587 = vpop.f32.mrb[0].mxu0
      %v1588 = vadd.f32 %v1194, %v1587
      %v1589 = vpop.f32.mrb[0].mxu0
      %v1590 = vpop.f32.mrb[0].mxu0
      %v1591 = vadd.f32 %v1194, %v1590
      %v1592 = vpop.f32.mrb[0].mxu0
      %1593 = vmatprep.mubr.bf16.mxu0 0
      %1594 = vmatmul.mubr.bf16.gmra.mrb[0].mxu0 %v1519
      %v1595 = vpop.f32.mrb[0].mxu0
      %v1596 = vadd.f32 %v1194, %v1595
      %v1597 = vpop.f32.mrb[0].mxu0
      %v1598 = vpop.f32.mrb[0].mxu0
      %v1599 = vpop.f32.mrb[0].mxu0
      %1600 = vdwg.mxu0
      %1601 = vst [vmem:[%s170] sm:$0xff] %v1556
      %1602 = vst [vmem:[%s170 + $0x8] sm:$0xff] %v1559
      %1603 = vst [vmem:[%s170 + $0x10] sm:$0xff] %v1564
      %1604 = vst [vmem:[%s170 + $0x18] sm:$0xff] %v1567
      %1605 = vst [vmem:[%s170 + $0x20] sm:$0xff] %v1572
      %1606 = vst [vmem:[%s170 + $0x28] sm:$0xff] %v1575
      %1607 = vst [vmem:[%s170 + $0x30] sm:$0xff] %v1580
      %1608 = vst [vmem:[%s170 + $0x38] sm:$0xff] %v1583
      %1609 = vst [vmem:[%s170 + $0x40] sm:$0xff] %v1588
      %1610 = vst [vmem:[%s170 + $0x48] sm:$0xff] %v1591
      %1611 = vst [vmem:[%s170 + $0x50] sm:$0x1] %v1596
      %p1612 = scmp.lt.s32.totalorder %s14, 1
      %s1613 = scalar_select %p1612, %s14, 1
      %s1614 = smul.addr %s1613, 11
      %s1615 = smul.addr %s1614, 8
      %s1616 = scalar_lea.vmem %s3, %s1615
      // Predicated region
      $region33: #{tpu_custom_call.1} parent=31 // pred_check
        %p1617 = pneg %p100
      $region34: #{tpu_custom_call.1} parent=31 // pred_check_branch
        %1619 = sbr.rel (%p1617) target = $region36
      $region35: #{tpu_custom_call.1} parent=31 // pred_region
        _
      $region36: #{tpu_custom_call.1} parent=31 // pred_fallthru
        _
    $region32: #{tpu_custom_call.1} parent=5 // pred_fallthru
      _
    %p1620 = scmp.le.s32.totalorder 2, %s9
    // Predicated region
    $region37: #{tpu_custom_call.1} parent=5 // pred_check
      %p1621 = pneg %p1620
    $region38: #{tpu_custom_call.1} parent=5 // pred_check_branch
      %1623 = sbr.rel (%p1621) target = $region40
    $region39: #{tpu_custom_call.1} parent=5 // pred_region
      %s1624 = ssub.s32 %s9, 2
      // Predicated region
      $region41: #{tpu_custom_call.1} parent=39 // pred_check
        %p1625 = pneg %p106
      $region42: #{tpu_custom_call.1} parent=39 // pred_check_branch
        %1627 = sbr.rel (%p1625) target = $region44
      $region43: #{tpu_custom_call.1} parent=39 // pred_region
        %p1628 = scmp.lt.s32.totalorder %s15, 1
        %s1629 = scalar_select %p1628, %s15, 1
        %s1630 = smul.addr %s1629, 11
        %s1631 = smul.addr %s1630, 8
        %s1632 = scalar_lea.vmem %s3, %s1631
      $region44: #{tpu_custom_call.1} parent=39 // pred_fallthru
        _
    $region40: #{tpu_custom_call.1} parent=5 // pred_fallthru
      _
  $region6: #{tpu_custom_call.1} parent=0 // loop_footer
    %s13 = sadd.s32 1, %s9
  $region7: #{tpu_custom_call.1} parent=0 // loop_footer_branch
    %8 = sbr.rel target = $region3
  $region8: #{tpu_custom_call.1} parent=0 // loop_exit
    _

</llo_original>
